<compile_context>
chip_gen: v7x
topology: tpu7x:2x2x1
jax: 0.10.0
libtpu: 0.0.40
codegen_flags: <defaults>
</compile_context>

<pallas_src>
import functools

import jax
import jax.numpy as jnp
from jax.experimental import pallas as pl
from jax.experimental.pallas import tpu as pltpu

EMBEDDING_DIM = 512
_LANE = 128


def siamese_kernel(x_ref, w_ref, b_ref, o_ref, acc_ref, *, hw_len, mask_tail):
    # x_ref  : (B_TILE*C, HW_TILE)   streamed input tile (sublane=batch*chan, lane=HW)
    # w_ref  : (C, 512)              resident projection weight (already scaled by 1/HW)
    # b_ref  : (1, 512)              resident bias
    # o_ref  : (B_TILE, 512)         output block (same block across the HW axis)
    # acc_ref: (B_TILE*C, 128) f32   per-lane running-sum accumulator (VMEM scratch)
    hw_i = pl.program_id(1)
    hw_tile = x_ref.shape[1]
    n_chunks = hw_tile // _LANE

    @pl.when(hw_i == 0)
    def _init():
        acc_ref[...] = jnp.zeros_like(acc_ref)

    # ---- Hot loop: pure VPU per-lane accumulation (no XLU cross-lane reduce
    # and no 1-lane masked stores in the steady state).
    acc = acc_ref[...]
    for k in range(n_chunks):                                   # static unroll
        xk = x_ref[:, k * _LANE:(k + 1) * _LANE].astype(jnp.float32)
        if mask_tail:
            # cdiv HW grid: the last block is partially out of bounds (garbage
            # reads); zero lanes past the true extent before accumulating.
            base = hw_i * hw_tile + k * _LANE
            lane = jax.lax.broadcasted_iota(jnp.int32, xk.shape, 1) + base
            xk = jnp.where(lane < hw_len, xk, 0.0)
        acc = acc + xk
    acc_ref[...] = acc

    @pl.when(hw_i == pl.num_programs(1) - 1)
    def _epilogue():
        bt = o_ref.shape[0]          # B_TILE
        c_dim = w_ref.shape[0]       # C (small for this stand-in backbone)

        # Projection: emb[b, n] = sum_c mean_feat[b, c] * w[c, n]  (+ bias).
        # With tiny C the MXU K-dim would be ~97% padding, so do it as a VPU
        # broadcast-MAC over strided channel slices of the accumulator
        # (epilogue-only; runs once per batch block).
        # TODO(synk): switch to an MXU jnp.dot((bt, C), (C, 512)) for large C.
        emb = jnp.zeros(o_ref.shape, jnp.float32)
        for c in range(c_dim):                                   # static, C small
            feat_c = jnp.sum(acc_ref[pl.ds(c, bt, stride=c_dim), :],
                             axis=-1, keepdims=True)             # (B_TILE, 1)
            emb = emb + feat_c * w_ref[pl.ds(c, 1), :]           # (B_TILE, 512)
        emb = emb + b_ref[...]                                   # broadcast bias

        # --- SiameseNetwork.forward_once ---
        # output.view(B, -1) is a no-op (already (B_TILE, 512)); then F.relu.
        emb = jnp.maximum(emb, 0.0)
        # F.normalize(p=2, dim=1, eps=1e-12): x / max(||x||_2, eps)
        #   == x * rsqrt(max(sum(x^2), eps^2))
        sumsq = jnp.sum(emb * emb, axis=1, keepdims=True)        # (B_TILE, 1)
        inv_norm = jax.lax.rsqrt(jnp.maximum(sumsq, 1e-24))
        o_ref[...] = (emb * inv_norm).astype(o_ref.dtype)


def _round_up(x, m):
    return ((x + m - 1) // m) * m


def _choose_b_tile(B, C, hw_eff, itemsize):
    # Epilogue working set (emb, emb*emb) is 2 f32 vregs per batch row at a
    # 512-wide embedding; cap B_TILE at 64 so it stays in ~half the vreg file.
    if B <= 64:
        b_tile = B
    else:
        b_tile = None
        for cand in range(64, 7, -8):        # prefer multiple-of-8 divisors of B
            if B % cand == 0:
                b_tile = cand
                break
        if b_tile is None:
            b_tile = 32                      # cdiv fallback; OOB output rows masked
    # v7x: give the "parallel" batch axis >= 2 blocks (both TensorCores busy)
    # whenever each half still moves a decent amount of data.
    if b_tile == B and B % 2 == 0 and (B // 2) % 8 == 0:
        if (B // 2) * C * hw_eff * itemsize >= 256 * 1024:
            b_tile = B // 2
    return b_tile


def _choose_hw_tile(rows, hw_eff, itemsize, target_bytes=1 << 20):
    # Largest 128-multiple lane tile giving an x block of ~1 MiB per buffer
    # (~2 MiB double-buffered): big enough to hit the HBM roofline and amortize
    # the ~0.35 us per-step overhead, small enough for the v7x 64 MiB VMEM.
    lanes = max(_LANE, (target_bytes // (rows * itemsize)) // _LANE * _LANE)
    return int(min(lanes, hw_eff))


def siamese_forward(x_nchw, w, b, *, b_tile=None, hw_tile=None):
    """x_nchw: (B, C, H, W); w: (C, 512); b: (1, 512) or (512,) -> (B, 512) f32."""
    B, C, H, W = x_nchw.shape
    assert w.shape[0] == C and w.shape[1] == EMBEDDING_DIM
    HW = H * W
    itemsize = jnp.dtype(x_nchw.dtype).itemsize

    # Dense layout: collapse (B, C) onto the sublane axis, HW onto lanes
    # (row-major, so this is a free view of the NCHW tensor).
    x2 = x_nchw.reshape(B * C, HW)
    # Lane-align HW only when needed; zero padding is exact for a running sum.
    hw_eff = HW if HW % _LANE == 0 else _round_up(HW, _LANE)
    if hw_eff != HW:
        x2 = jnp.pad(x2, ((0, 0), (0, hw_eff - HW)))

    # Fold the 1/HW global-average-pool factor into the projection weight so
    # the kernel accumulates a pure running sum.  x may be bf16 from upstream;
    # the kernel upconverts to f32 right after load (v5e-safe).
    w_scaled = w.astype(jnp.float32) * (1.0 / HW)
    b2 = b.reshape(1, EMBEDDING_DIM).astype(jnp.float32)

    if b_tile is None:
        b_tile = _choose_b_tile(B, C, hw_eff, itemsize)
    rows = b_tile * C
    if hw_tile is None:
        hw_tile = _choose_hw_tile(rows, hw_eff, itemsize)
    assert hw_tile % _LANE == 0

    grid = (pl.cdiv(B, b_tile), pl.cdiv(hw_eff, hw_tile))
    mask_tail = (hw_eff % hw_tile) != 0

    kernel = functools.partial(siamese_kernel, hw_len=hw_eff, mask_tail=mask_tail)

    # VMEM budget: double-buffered x blocks + resident params + output block +
    # accumulator, with headroom; capped at 48 MiB so it is v7x (64 MiB) safe.
    x_block_bytes = rows * hw_tile * itemsize
    vmem_need = (2 * x_block_bytes
                 + 2 * (C + 1 + b_tile) * EMBEDDING_DIM * 4
                 + rows * _LANE * 4)
    vmem_limit = int(min(max(4 * vmem_need, 32 << 20), 48 << 20))

    flops = (2 * B * C * HW                       # spatial reduction
             + 2 * B * C * EMBEDDING_DIM          # projection MAC
             + 4 * B * EMBEDDING_DIM)             # relu + normalize
    bytes_accessed = (x2.size * itemsize + (w_scaled.size + b2.size) * 4
                      + B * EMBEDDING_DIM * 4)

    return pl.pallas_call(
        kernel,
        out_shape=jax.ShapeDtypeStruct((B, EMBEDDING_DIM), jnp.float32),
        grid_spec=pltpu.PrefetchScalarGridSpec(
            num_scalar_prefetch=0,
            grid=grid,
            in_specs=[
                # Streamed, double-buffered x tiles.
                pl.BlockSpec((rows, hw_tile), lambda bi, hi: (bi, hi)),
                # Resident weight / bias (same block for every grid point).
                pl.BlockSpec((C, EMBEDDING_DIM), lambda bi, hi: (0, 0)),
                pl.BlockSpec((1, EMBEDDING_DIM), lambda bi, hi: (0, 0)),
            ],
            # Same output block across the HW (reduction) axis; written only on
            # the last HW step.  Lane-dense (512-wide) store.
            out_specs=pl.BlockSpec((b_tile, EMBEDDING_DIM), lambda bi, hi: (bi, 0)),
            scratch_shapes=[pltpu.VMEM((rows, _LANE), jnp.float32)],
        ),
        compiler_params=pltpu.CompilerParams(
            dimension_semantics=("parallel", "arbitrary"),
            vmem_limit_bytes=vmem_limit,
        ),
        cost_estimate=pl.CostEstimate(
            flops=flops, transcendentals=B, bytes_accessed=bytes_accessed),
    )(x2, w_scaled, b2)


if __name__ == "__main__":
    key = jax.random.PRNGKey(0)
    k1, k2, k3 = jax.random.split(key, 3)

    def make_inputs(k, B, C, H, W):
        k_x, k_w, k_b = jax.random.split(k, 3)
        x = jax.random.normal(k_x, (B, C, H, W), dtype=jnp.float32)
        w = (jax.random.normal(k_w, (C, EMBEDDING_DIM), dtype=jnp.float32)
             * (1.0 / jnp.sqrt(C)))
        b = jax.random.normal(k_b, (1, EMBEDDING_DIM), dtype=jnp.float32) * 0.01
        return x, w, b

    def reference(x, w, b):
        B, C, H, W = x.shape
        feat = x.reshape(B, C, H * W).mean(axis=-1)
        emb = jnp.maximum(feat @ w + b.reshape(1, -1), 0.0)
        nrm = jnp.linalg.norm(emb, axis=1, keepdims=True)
        return emb / jnp.maximum(nrm, 1e-12)

    # 1) Module-default small shape (collapses to a single grid point).
    x, w, b = make_inputs(k1, 2, 4, 16, 16)
    out = jax.block_until_ready(siamese_forward(x, w, b))
    assert out.shape == (2, EMBEDDING_DIM)
    ref = reference(x, w, b)
    assert jnp.allclose(out, ref, atol=1e-4), float(jnp.max(jnp.abs(out - ref)))
    norms = jnp.linalg.norm(out, axis=1)
    assert bool(jnp.all(jnp.abs(norms - 1.0) < 1e-3)), norms

    # 2) Multi-step HW pipeline with a cdiv tail (exercises the in-kernel mask).
    x, w, b = make_inputs(k2, 2, 4, 16, 40)              # HW = 640, tile 256 -> 3 steps
    out = jax.block_until_ready(siamese_forward(x, w, b, hw_tile=256))
    ref = reference(x, w, b)
    assert jnp.allclose(out, ref, atol=1e-4), float(jnp.max(jnp.abs(out - ref)))

    # 3) Non-128-multiple spatial extent (zero-padded lane view in the wrapper).
    x, w, b = make_inputs(k3, 4, 4, 15, 15)              # HW = 225 -> padded to 256
    out = jax.block_until_ready(siamese_forward(x, w, b))
    ref = reference(x, w, b)
    assert jnp.allclose(out, ref, atol=1e-4), float(jnp.max(jnp.abs(out - ref)))

    print("KERNEL_OK")
</pallas_src>

<mosaic_0001>
module attributes {stable_mosaic.version = 11 : i64} {
  func.func @siamese_kernel(%arg0: i32, %arg1: i32, %arg2: memref<8x256xf32, #tpu.memory_space<vmem>>, %arg3: memref<4x512xf32, #tpu.memory_space<vmem>>, %arg4: memref<1x512xf32, #tpu.memory_space<vmem>>, %arg5: memref<2x512xf32, #tpu.memory_space<vmem>>, %arg6: memref<8x128xf32, #tpu.memory_space<vmem>>) attributes {dimension_semantics = [#tpu.dimension_semantics<parallel>, #tpu.dimension_semantics<arbitrary>], iteration_bounds = array<i64: 1, 1>, scalar_prefetch = 0 : i64, scratch_operands = 1 : i64, tpu.core_type = #tpu.core_type<tc>, window_params = [{transform_indices = @transform_0, window_bounds = array<i64: 8, 256>}, {pipeline_mode = #tpu.pipeline_mode<synchronous>, transform_indices = @transform_1, window_bounds = array<i64: 4, 512>}, {pipeline_mode = #tpu.pipeline_mode<synchronous>, transform_indices = @transform_2, window_bounds = array<i64: 1, 512>}, {transform_indices = @transform_3, window_bounds = array<i64: 2, 512>}]} {
    %c0_i32 = arith.constant 0 : i32
    %0 = arith.cmpi eq, %arg1, %c0_i32 : i32
    %1 = arith.extui %0 : i1 to i32
    %c0_i32_0 = arith.constant 0 : i32
    %2 = arith.cmpi ne, %1, %c0_i32_0 : i32
    scf.if %2 {
      %cst = arith.constant 0.000000e+00 : f32
      %12 = vector.broadcast %cst : f32 to vector<8x128xf32>
      %c0_9 = arith.constant 0 : index
      %c0_10 = arith.constant 0 : index
      %13 = vector.load %arg6[%c0_9, %c0_10] : memref<8x128xf32, #tpu.memory_space<vmem>>, vector<8x128xf32>
      tpu.vector_store %arg6[%c0_9, %c0_10], %12 {strides = array<i32>} : memref<8x128xf32, #tpu.memory_space<vmem>>, vector<8x128xf32>,
    } else {
    }
    %c0 = arith.constant 0 : index
    %c0_1 = arith.constant 0 : index
    %3 = vector.load %arg6[%c0, %c0_1] : memref<8x128xf32, #tpu.memory_space<vmem>>, vector<8x128xf32>
    %c0_2 = arith.constant 0 : index
    %c0_3 = arith.constant 0 : index
    %4 = vector.load %arg2[%c0_2, %c0_3] : memref<8x256xf32, #tpu.memory_space<vmem>>, vector<8x128xf32>
    %5 = arith.addf %3, %4 : vector<8x128xf32>
    %c0_4 = arith.constant 0 : index
    %c128 = arith.constant 128 : index
    %6 = vector.load %arg2[%c0_4, %c128] : memref<8x256xf32, #tpu.memory_space<vmem>>, vector<8x128xf32>
    %7 = arith.addf %5, %6 : vector<8x128xf32>
    %c0_5 = arith.constant 0 : index
    %c0_6 = arith.constant 0 : index
    %8 = vector.load %arg6[%c0_5, %c0_6] : memref<8x128xf32, #tpu.memory_space<vmem>>, vector<8x128xf32>
    tpu.vector_store %arg6[%c0_5, %c0_6], %7 {strides = array<i32>} : memref<8x128xf32, #tpu.memory_space<vmem>>, vector<8x128xf32>,
    %c0_i32_7 = arith.constant 0 : i32
    %9 = arith.cmpi eq, %arg1, %c0_i32_7 : i32
    %10 = arith.extui %9 : i1 to i32
    %c0_i32_8 = arith.constant 0 : i32
    %11 = arith.cmpi ne, %10, %c0_i32_8 : i32
    scf.if %11 {
      %cst = arith.constant 0.000000e+00 : f32
      %12 = vector.broadcast %cst : f32 to vector<2x512xf32>
      %c0_9 = arith.constant 0 : index
      %c0_10 = arith.constant 0 : index
      %13 = tpu.strided_load %arg6[%c0_9, %c0_10] {strides = array<i32: 4, 1>} : memref<8x128xf32, #tpu.memory_space<vmem>>, vector<2x128xf32>
      %cst_11 = arith.constant dense<0.000000e+00> : vector<2xf32>
      %14 = vector.multi_reduction <add>, %13, %cst_11 [1] : vector<2x128xf32> to vector<2xf32>
      %15 = vector.shape_cast %14 : vector<2xf32> to vector<2x1xf32>
      %c0_12 = arith.constant 0 : index
      %c0_13 = arith.constant 0 : index
      %16 = vector.load %arg3[%c0_12, %c0_13] : memref<4x512xf32, #tpu.memory_space<vmem>>, vector<1x512xf32>
      %17 = vector.broadcast %15 : vector<2x1xf32> to vector<2x512xf32>
      %18 = vector.broadcast %16 : vector<1x512xf32> to vector<2x512xf32>
      %19 = arith.mulf %17, %18 : vector<2x512xf32>
      %20 = arith.addf %12, %19 : vector<2x512xf32>
      %c1 = arith.constant 1 : index
      %c0_14 = arith.constant 0 : index
      %21 = tpu.strided_load %arg6[%c1, %c0_14] {strides = array<i32: 4, 1>} : memref<8x128xf32, #tpu.memory_space<vmem>>, vector<2x128xf32>
      %cst_15 = arith.constant dense<0.000000e+00> : vector<2xf32>
      %22 = vector.multi_reduction <add>, %21, %cst_15 [1] : vector<2x128xf32> to vector<2xf32>
      %23 = vector.shape_cast %22 : vector<2xf32> to vector<2x1xf32>
      %c1_16 = arith.constant 1 : index
      %c0_17 = arith.constant 0 : index
      %24 = vector.load %arg3[%c1_16, %c0_17] : memref<4x512xf32, #tpu.memory_space<vmem>>, vector<1x512xf32>
      %25 = vector.broadcast %23 : vector<2x1xf32> to vector<2x512xf32>
      %26 = vector.broadcast %24 : vector<1x512xf32> to vector<2x512xf32>
      %27 = arith.mulf %25, %26 : vector<2x512xf32>
      %28 = arith.addf %20, %27 : vector<2x512xf32>
      %c2 = arith.constant 2 : index
      %c0_18 = arith.constant 0 : index
      %29 = tpu.strided_load %arg6[%c2, %c0_18] {strides = array<i32: 4, 1>} : memref<8x128xf32, #tpu.memory_space<vmem>>, vector<2x128xf32>
      %cst_19 = arith.constant dense<0.000000e+00> : vector<2xf32>
      %30 = vector.multi_reduction <add>, %29, %cst_19 [1] : vector<2x128xf32> to vector<2xf32>
      %31 = vector.shape_cast %30 : vector<2xf32> to vector<2x1xf32>
      %c2_20 = arith.constant 2 : index
      %c0_21 = arith.constant 0 : index
      %32 = vector.load %arg3[%c2_20, %c0_21] : memref<4x512xf32, #tpu.memory_space<vmem>>, vector<1x512xf32>
      %33 = vector.broadcast %31 : vector<2x1xf32> to vector<2x512xf32>
      %34 = vector.broadcast %32 : vector<1x512xf32> to vector<2x512xf32>
      %35 = arith.mulf %33, %34 : vector<2x512xf32>
      %36 = arith.addf %28, %35 : vector<2x512xf32>
      %c3 = arith.constant 3 : index
      %c0_22 = arith.constant 0 : index
      %37 = tpu.strided_load %arg6[%c3, %c0_22] {strides = array<i32: 4, 1>} : memref<8x128xf32, #tpu.memory_space<vmem>>, vector<2x128xf32>
      %cst_23 = arith.constant dense<0.000000e+00> : vector<2xf32>
      %38 = vector.multi_reduction <add>, %37, %cst_23 [1] : vector<2x128xf32> to vector<2xf32>
      %39 = vector.shape_cast %38 : vector<2xf32> to vector<2x1xf32>
      %c3_24 = arith.constant 3 : index
      %c0_25 = arith.constant 0 : index
      %40 = vector.load %arg3[%c3_24, %c0_25] : memref<4x512xf32, #tpu.memory_space<vmem>>, vector<1x512xf32>
      %41 = vector.broadcast %39 : vector<2x1xf32> to vector<2x512xf32>
      %42 = vector.broadcast %40 : vector<1x512xf32> to vector<2x512xf32>
      %43 = arith.mulf %41, %42 : vector<2x512xf32>
      %44 = arith.addf %36, %43 : vector<2x512xf32>
      %c0_26 = arith.constant 0 : index
      %c0_27 = arith.constant 0 : index
      %45 = vector.load %arg4[%c0_26, %c0_27] : memref<1x512xf32, #tpu.memory_space<vmem>>, vector<1x512xf32>
      %46 = vector.broadcast %45 : vector<1x512xf32> to vector<2x512xf32>
      %47 = arith.addf %44, %46 : vector<2x512xf32>
      %cst_28 = arith.constant 0.000000e+00 : f32
      %48 = vector.broadcast %cst_28 : f32 to vector<2x512xf32>
      %49 = arith.maximumf %47, %48 : vector<2x512xf32>
      %50 = arith.mulf %49, %49 : vector<2x512xf32>
      %cst_29 = arith.constant dense<0.000000e+00> : vector<2xf32>
      %51 = vector.multi_reduction <add>, %50, %cst_29 [1] : vector<2x512xf32> to vector<2xf32>
      %52 = vector.shape_cast %51 : vector<2xf32> to vector<2x1xf32>
      %cst_30 = arith.constant 1.000000e-24 : f32
      %53 = vector.broadcast %cst_30 : f32 to vector<2x1xf32>
      %54 = arith.maximumf %52, %53 : vector<2x1xf32>
      %55 = math.rsqrt %54 : vector<2x1xf32>
      %56 = vector.broadcast %55 : vector<2x1xf32> to vector<2x512xf32>
      %57 = arith.mulf %49, %56 : vector<2x512xf32>
      %c0_31 = arith.constant 0 : index
      %c0_32 = arith.constant 0 : index
      %58 = vector.load %arg5[%c0_31, %c0_32] : memref<2x512xf32, #tpu.memory_space<vmem>>, vector<2x512xf32>
      tpu.vector_store %arg5[%c0_31, %c0_32], %57 {strides = array<i32>} : memref<2x512xf32, #tpu.memory_space<vmem>>, vector<2x512xf32>,
    } else {
    }
    return
  }
  func.func @transform_0(%arg0: i32, %arg1: i32) -> (i32, i32) {
    %c0_i32 = arith.constant 0 : i32
    return %arg0, %arg1 : i32, i32
  }
  func.func @transform_1(%arg0: i32, %arg1: i32) -> (i32, i32) {
    %c0_i32 = arith.constant 0 : i32
    %c0_i32_0 = arith.constant 0 : i32
    %c0_i32_1 = arith.constant 0 : i32
    return %c0_i32, %c0_i32_0 : i32, i32
  }
  func.func @transform_2(%arg0: i32, %arg1: i32) -> (i32, i32) {
    %c0_i32 = arith.constant 0 : i32
    %c0_i32_0 = arith.constant 0 : i32
    %c0_i32_1 = arith.constant 0 : i32
    return %c0_i32, %c0_i32_0 : i32, i32
  }
  func.func @transform_3(%arg0: i32, %arg1: i32) -> (i32, i32) {
    %c0_i32 = arith.constant 0 : i32
    %c0_i32_0 = arith.constant 0 : i32
    return %arg0, %c0_i32 : i32, i32
  }
}

</mosaic_0001>

<llo_original>
// kernel: tpu_custom_call.1
$region0: #{tpu_custom_call.1}
  #allocation0 [shape = 'u32[]', space=smem, size = 0x4, offset = 0x4, fixed_abs, tag = 'smem constant byte address 0x4 - core index']
  #allocation1 [shape = 'u32[144,128]{1,0:T(1,128)}', space=vmem, size = 0x12000, scoped, tag = 'internal scratch']
  #allocation2 [shape = 'f32[8,128]{1,0:T(8,128)}', space=vmem, size = 0x1000, scoped, tag = 'scratch operand']
  %s0 = inlined_call_operand.hbm [shape: f32[8,256], index: 0, kind: input, shape index: {}]
  %s1 = inlined_call_operand.hbm [shape: f32[4,512], index: 1, kind: input, shape index: {}]
  %s2 = inlined_call_operand.vmem [shape: f32[1,512], index: 2, kind: input, shape index: {}]
  %s3 = inlined_call_operand.hbm [shape: f32[2,512], index: 3, kind: output, shape index: {}]
  %s4 = sld [smem:[#allocation0]]
  $region38: #{tpu_custom_call.1} parent=0
    _
  %s6 = ssub.s32 1, %s4
  %s7 = scalar_select 0, %s6, %s4
  $region1: #{tpu_custom_call.1} parent=0
    #allocation3 [shape = 'u8[8192]{0}', space=vmem, size = 0x2000, scoped, tag = 'input window, operand 0, single buffered']
    #allocation4 [shape = 's32[1]{0}', space=sflag, size = 0x4, scoped, tag = 'scoped memory for tpu_custom_call.1']
    #allocation5 [shape = 's32[1]{0}', space=sflag, size = 0x4, scoped, tag = 'scoped memory for tpu_custom_call.1']
    #allocation6 [shape = 'u8[8192]{0}', space=vmem, size = 0x2000, scoped, tag = 'input window, operand 1, single buffered']
    #allocation7 [shape = 's32[1]{0}', space=sflag, size = 0x4, scoped, tag = 'scoped memory for tpu_custom_call.1']
    #allocation8 [shape = 'u8[4096]{0}', space=vmem, size = 0x1000, scoped, tag = 'output window, operand 0, single buffered']
    %8 = vsyncpa [#allocation4], 0
    %9 = vsyncpa [#allocation7], 0
    %10 = vsyncpa [#allocation5], 0
    // Predicated region
    $region2: #{tpu_custom_call.1} parent=1 // pred_check
      _
    $region3: #{tpu_custom_call.1} parent=1 // pred_check_branch
      %12 = sbr.rel (0) target = $region5
    $region4: #{tpu_custom_call.1} parent=1 // pred_region
      %s14 = ssub.s32 256, 256
      %15 = vsyncadd [#allocation4], %s14
      %s17 = sshll.u32 [#allocation3], 4
      %s18 = int_to_ptr.vmem [resolvable:$true] %s17
      %20 = dma.hbm_to_vmem [thread:$0]  %s0, 256, %s18, [#allocation4]
    $region5: #{tpu_custom_call.1} parent=1 // pred_fallthru
      _
    // Predicated region
    $region6: #{tpu_custom_call.1} parent=1 // pred_check
      _
    $region7: #{tpu_custom_call.1} parent=1 // pred_check_branch
      %22 = sbr.rel (0) target = $region9
    $region8: #{tpu_custom_call.1} parent=1 // pred_region
      %s24 = ssub.s32 256, 256
      %25 = vsyncadd [#allocation7], %s24
      %s27 = sshll.u32 [#allocation6], 4
      %s28 = int_to_ptr.vmem [resolvable:$true] %s27
      %30 = dma.hbm_to_vmem [thread:$0]  %s1, 256, %s28, [#allocation7]
    $region9: #{tpu_custom_call.1} parent=1 // pred_fallthru
      _
    // Predicated region
    $region10: #{tpu_custom_call.1} parent=1 // pred_check
      _
    $region11: #{tpu_custom_call.1} parent=1 // pred_check_branch
      %32 = sbr.rel (0) target = $region13
    $region12: #{tpu_custom_call.1} parent=1 // pred_region
      _
    $region13: #{tpu_custom_call.1} parent=1 // pred_fallthru
      _
    // Predicated region
    $region14: #{tpu_custom_call.1} parent=1 // pred_check
      _
    $region15: #{tpu_custom_call.1} parent=1 // pred_check_branch
      %34 = sbr.rel (0) target = $region17
    $region16: #{tpu_custom_call.1} parent=1 // pred_region
      %35 = dma.done [#allocation4], 256
    $region17: #{tpu_custom_call.1} parent=1 // pred_fallthru
      _
    // Predicated region
    $region18: #{tpu_custom_call.1} parent=1 // pred_check
      _
    $region19: #{tpu_custom_call.1} parent=1 // pred_check_branch
      %37 = sbr.rel (0) target = $region21
    $region20: #{tpu_custom_call.1} parent=1 // pred_region
      %38 = dma.done [#allocation7], 256
    $region21: #{tpu_custom_call.1} parent=1 // pred_fallthru
      _
    %p39 = scmp.eq.s32.totalorder 0, 0
    // Predicated region
    $region22: #{tpu_custom_call.1} parent=1 // pred_check
      %p40 = pneg %p39
    $region23: #{tpu_custom_call.1} parent=1 // pred_check_branch
      %42 = sbr.rel (%p40) target = $region25
    $region24: #{tpu_custom_call.1} parent=1 // pred_region
      %43 = vst [vmem:[#allocation2] sm:$0xff] 0.0
    $region25: #{tpu_custom_call.1} parent=1 // pred_fallthru
      _
    %v44 = vld [vmem:[#allocation2] sm:$0xff]
    %v45 = vld [vmem:[#allocation3] sm:$0xff]
    %v46 = vadd.f32 %v44, %v45
    %v47 = vld [vmem:[#allocation3 + $0x8] sm:$0xff]
    %v48 = vadd.f32 %v46, %v47
    %49 = vst [vmem:[#allocation2] sm:$0xff] %v48
    // Predicated region
    $region26: #{tpu_custom_call.1} parent=1 // pred_check
      %p50 = pneg %p39
    $region27: #{tpu_custom_call.1} parent=1 // pred_check_branch
      %52 = sbr.rel (%p50) target = $region29
    $region28: #{tpu_custom_call.1} parent=1 // pred_region
      %v53 = vld [vmem:[#allocation2] ss:$4 sm:$0x3]
      %vm54 = vcmask 1041408
      %v55 = vsel %vm54, %v53, 0.0
      %56 = vadd.xlane.f32.xlu0 %v55
      %v57 = vpop.xlane.xlu0 %56
      %v58 = vld [vmem:[#allocation6] ss:$4 sm:$0xf]
      %v60 = vlaneseq
      %v61 = vshrl.u32 %v60, 7
      %v62 = vsub.s32 0, %v61
      %v63 = vrot.slane %v58, %v62
      %v64 = vlaneseq
      %v65 = vshrl.u32 %v64, 7
      %v66 = vsub.s32 1, %v65
      %v67 = vrot.slane %v58, %v66
      %v68 = vlaneseq
      %v69 = vshrl.u32 %v68, 7
      %v70 = vsub.s32 2, %v69
      %v71 = vrot.slane %v58, %v70
      %v72 = vlaneseq
      %v73 = vshrl.u32 %v72, 7
      %v74 = vsub.s32 3, %v73
      %v75 = vrot.slane %v58, %v74
      %v80 = vmul.f32 %v57, %v63
      %v81 = vmul.f32 %v57, %v67
      %v82 = vmul.f32 %v57, %v71
      %v83 = vmul.f32 %v57, %v75
      %v84 = vadd.f32 %v80, 0.0
      %v85 = vadd.f32 %v81, 0.0
      %v86 = vadd.f32 %v82, 0.0
      %v87 = vadd.f32 %v83, 0.0
      %s88 = scalar_lea.vmem [#allocation2], 1
      %v89 = vld [vmem:[%s88] ss:$4 sm:$0x3]
      %v90 = vsel %vm54, %v89, 0.0
      %91 = vadd.xlane.f32.xlu0 %v90
      %v92 = vpop.xlane.xlu0 %91
      %s93 = scalar_lea.vmem [#allocation6], 1
      %v94 = vld [vmem:[%s93] ss:$4 sm:$0xf]
      %v96 = vlaneseq
      %v97 = vshrl.u32 %v96, 7
      %v98 = vsub.s32 0, %v97
      %v99 = vrot.slane %v94, %v98
      %v100 = vlaneseq
      %v101 = vshrl.u32 %v100, 7
      %v102 = vsub.s32 1, %v101
      %v103 = vrot.slane %v94, %v102
      %v104 = vlaneseq
      %v105 = vshrl.u32 %v104, 7
      %v106 = vsub.s32 2, %v105
      %v107 = vrot.slane %v94, %v106
      %v108 = vlaneseq
      %v109 = vshrl.u32 %v108, 7
      %v110 = vsub.s32 3, %v109
      %v111 = vrot.slane %v94, %v110
      %v116 = vmul.f32 %v92, %v99
      %v117 = vmul.f32 %v92, %v103
      %v118 = vmul.f32 %v92, %v107
      %v119 = vmul.f32 %v92, %v111
      %v120 = vadd.f32 %v84, %v116
      %v121 = vadd.f32 %v85, %v117
      %v122 = vadd.f32 %v86, %v118
      %v123 = vadd.f32 %v87, %v119
      %s124 = scalar_lea.vmem [#allocation2], 2
      %v125 = vld [vmem:[%s124] ss:$4 sm:$0x3]
      %v126 = vsel %vm54, %v125, 0.0
      %127 = vadd.xlane.f32.xlu0 %v126
      %v128 = vpop.xlane.xlu0 %127
      %s129 = scalar_lea.vmem [#allocation6], 2
      %v130 = vld [vmem:[%s129] ss:$4 sm:$0xf]
      %v132 = vlaneseq
      %v133 = vshrl.u32 %v132, 7
      %v134 = vsub.s32 0, %v133
      %v135 = vrot.slane %v130, %v134
      %v136 = vlaneseq
      %v137 = vshrl.u32 %v136, 7
      %v138 = vsub.s32 1, %v137
      %v139 = vrot.slane %v130, %v138
      %v140 = vlaneseq
      %v141 = vshrl.u32 %v140, 7
      %v142 = vsub.s32 2, %v141
      %v143 = vrot.slane %v130, %v142
      %v144 = vlaneseq
      %v145 = vshrl.u32 %v144, 7
      %v146 = vsub.s32 3, %v145
      %v147 = vrot.slane %v130, %v146
      %v152 = vmul.f32 %v128, %v135
      %v153 = vmul.f32 %v128, %v139
      %v154 = vmul.f32 %v128, %v143
      %v155 = vmul.f32 %v128, %v147
      %v156 = vadd.f32 %v120, %v152
      %v157 = vadd.f32 %v121, %v153
      %v158 = vadd.f32 %v122, %v154
      %v159 = vadd.f32 %v123, %v155
      %s160 = scalar_lea.vmem [#allocation2], 3
      %v161 = vld [vmem:[%s160] ss:$4 sm:$0x3]
      %v162 = vsel %vm54, %v161, 0.0
      %163 = vadd.xlane.f32.xlu0 %v162
      %v164 = vpop.xlane.xlu0 %163
      %s165 = scalar_lea.vmem [#allocation6], 3
      %v166 = vld [vmem:[%s165] ss:$4 sm:$0xf]
      %v168 = vlaneseq
      %v169 = vshrl.u32 %v168, 7
      %v170 = vsub.s32 0, %v169
      %v171 = vrot.slane %v166, %v170
      %v172 = vlaneseq
      %v173 = vshrl.u32 %v172, 7
      %v174 = vsub.s32 1, %v173
      %v175 = vrot.slane %v166, %v174
      %v176 = vlaneseq
      %v177 = vshrl.u32 %v176, 7
      %v178 = vsub.s32 2, %v177
      %v179 = vrot.slane %v166, %v178
      %v180 = vlaneseq
      %v181 = vshrl.u32 %v180, 7
      %v182 = vsub.s32 3, %v181
      %v183 = vrot.slane %v166, %v182
      %v188 = vmul.f32 %v164, %v171
      %v189 = vmul.f32 %v164, %v175
      %v190 = vmul.f32 %v164, %v179
      %v191 = vmul.f32 %v164, %v183
      %v192 = vadd.f32 %v156, %v188
      %v193 = vadd.f32 %v157, %v189
      %v194 = vadd.f32 %v158, %v190
      %v195 = vadd.f32 %v159, %v191
      %v196 = vld [vmem:[%s2] sm:$0xf]
      %v198 = vlaneseq
      %v199 = vshrl.u32 %v198, 7
      %v200 = vsub.s32 0, %v199
      %v201 = vrot.slane %v196, %v200
      %v202 = vlaneseq
      %v203 = vshrl.u32 %v202, 7
      %v204 = vsub.s32 1, %v203
      %v205 = vrot.slane %v196, %v204
      %v206 = vlaneseq
      %v207 = vshrl.u32 %v206, 7
      %v208 = vsub.s32 2, %v207
      %v209 = vrot.slane %v196, %v208
      %v210 = vlaneseq
      %v211 = vshrl.u32 %v210, 7
      %v212 = vsub.s32 3, %v211
      %v213 = vrot.slane %v196, %v212
      %v218 = vadd.f32 %v192, %v201
      %v219 = vadd.f32 %v193, %v205
      %v220 = vadd.f32 %v194, %v209
      %v221 = vadd.f32 %v195, %v213
      %v222 = vmax.f32 %v218, 0.0
      %v223 = vmax.f32 %v219, 0.0
      %v224 = vmax.f32 %v220, 0.0
      %v225 = vmax.f32 %v221, 0.0
      %v226 = vmul.f32 %v222, %v222
      %v227 = vmul.f32 %v223, %v223
      %v228 = vmul.f32 %v224, %v224
      %v229 = vmul.f32 %v225, %v225
      %v230 = vsel %vm54, %v226, 0.0
      %v231 = vsel %vm54, %v227, 0.0
      %v232 = vadd.f32 %v230, %v231
      %v233 = vsel %vm54, %v228, 0.0
      %v234 = vadd.f32 %v232, %v233
      %v235 = vsel %vm54, %v229, 0.0
      %v236 = vadd.f32 %v234, %v235
      %237 = vadd.xlane.f32.xlu0 %v236
      %v238 = vpop.xlane.xlu0 %237
      %v239 = vmax.f32 %v238, 1e-24
      %v240 = vrsqrt.pop %v239
      %v241 = vmul.f32 %v222, %v240
      %v242 = vmul.f32 %v223, %v240
      %v243 = vmul.f32 %v224, %v240
      %v244 = vmul.f32 %v225, %v240
      %v249 = vcombine.low %v241, %v242
      %v250 = vcombine.low %v243, %v244
      %v252 = vunpack.c.l.s4 1983009808
      %v253 = vunpack.c.0.s8 %v252
      %v254 = vlaneseq
      %v255 = vshrl.u32 %v254, 7
      %v256 = vsub.s32 %v253, %v255
      %v257 = vrot.slane %v249, %v256
      %v259 = vunpack.c.l.s4 1983009808
      %v260 = vunpack.c.0.s8 %v259
      %v261 = vlaneseq
      %v262 = vshrl.u32 %v261, 7
      %v263 = vsub.s32 %v260, %v262
      %v264 = vrot.slane %v250, %v263
      %v265 = vcombine.low %v257, %v264
      %267 = vst [vmem:[#allocation8] sm:$0xff] %v265
    $region29: #{tpu_custom_call.1} parent=1 // pred_fallthru
      _
    // Predicated region
    $region30: #{tpu_custom_call.1} parent=1 // pred_check
      _
    $region31: #{tpu_custom_call.1} parent=1 // pred_check_branch
      %269 = sbr.rel (0) target = $region33
    $region32: #{tpu_custom_call.1} parent=1 // pred_region
      %s271 = ssub.s32 128, 128
      %272 = vsyncadd [#allocation5], %s271
      %s274 = sshll.u32 [#allocation8], 4
      %s275 = int_to_ptr.vmem [resolvable:$true] %s274
      %277 = dma.vmem_to_hbm [thread:$0]  %s275, 128, %s3, [#allocation5]
    $region33: #{tpu_custom_call.1} parent=1 // pred_fallthru
      _
    // Predicated region
    $region34: #{tpu_custom_call.1} parent=1 // pred_check
      _
    $region35: #{tpu_custom_call.1} parent=1 // pred_check_branch
      %279 = sbr.rel (0) target = $region37
    $region36: #{tpu_custom_call.1} parent=1 // pred_region
      %280 = dma.done [#allocation5], 128
    $region37: #{tpu_custom_call.1} parent=1 // pred_fallthru
      _
    %281 = vsyncpa [#allocation4], 1
    %282 = vsyncpa [#allocation7], 1
    %283 = vsyncpa [#allocation5], 1

</llo_original>
